<compile_context>
chip_gen: v5e
topology: v5e:2x2
jax: 0.10.0
libtpu: 0.0.40
codegen_flags: <defaults>
</compile_context>

<pallas_src>
import functools

import jax
import jax.numpy as jnp
from jax import lax
from jax.experimental import pallas as pl
from jax.experimental.pallas import tpu as pltpu

_LANE = 128
_EPS = 1e-12  # matches F.normalize eps


def _meta_baseline_kernel(temp_ref, shot_ref, query_ref, out_ref, *, method):
    # temp_ref  : SMEM (1,) f32   (scalar-prefetched temperature)
    # shot_ref  : VMEM (BB, n_way, n_shot, D)
    # query_ref : VMEM (BB, BQ, D)
    # out_ref   : VMEM (BB, BQ, wp)   with wp a multiple of 128
    temp = temp_ref[0]
    bb, n_way, n_shot, d = shot_ref.shape
    wp = out_ref.shape[-1]

    shot = shot_ref[...]
    query = query_ref[...]

    # Class prototypes: f32-accumulated mean over shots (no full f32 copy of
    # the shot block kept live).
    proto = jnp.sum(shot, axis=2, dtype=jnp.float32) * (1.0 / n_shot)  # (BB,W,D)

    # Zero-pad the class axis to the lane-dense output width so the matmul
    # emits (BB, Q, wp) directly and the store is one unmasked full block.
    if wp > n_way:
        proto = jnp.concatenate(
            [proto, jnp.zeros((bb, wp - n_way, d), jnp.float32)], axis=1)

    p_sq = jnp.sum(proto * proto, axis=-1)                              # (BB,wp)
    q_sq = jnp.sum(query.astype(jnp.float32) ** 2,
                   axis=-1, keepdims=True)                              # (BB,Q,1)

    if method == "cos":
        # Unnormalized MXU dot (input-dtype operands, f32 accumulation), then
        # rescale by rsqrt(||q||^2) * rsqrt(||p||^2); clamp matches
        # F.normalize's max(||x||, eps).  Temperature folded into the multiply.
        raw = jnp.einsum("bqd,bwd->bqw", query, proto.astype(query.dtype),
                         preferred_element_type=jnp.float32)            # (BB,Q,wp)
        inv_q = lax.rsqrt(jnp.maximum(q_sq, _EPS * _EPS))
        inv_p = lax.rsqrt(jnp.maximum(p_sq, _EPS * _EPS))
        logits = raw * (temp * inv_q) * inv_p[:, None, :]
    elif method == "sqr":
        # -||q - p||^2 = 2 q.p - ||q||^2 - ||p||^2.  f32 dot operands to limit
        # cancellation error when q ~= p.
        raw = jnp.einsum("bqd,bwd->bqw", query.astype(jnp.float32), proto,
                         preferred_element_type=jnp.float32)
        logits = (2.0 * raw - q_sq - p_sq[:, None, :]) * temp
    else:
        raise ValueError(f"unknown method {method!r}")

    # Single unmasked full-width store (padded columns hold inert values that
    # the wrapper slices away).
    out_ref[...] = logits.astype(out_ref.dtype)


def meta_baseline(x_shot_feat, x_query_feat, temp,
                  batch_size, n_way, n_shot, n_query,
                  method="cos", block_b=None, block_q=None,
                  cast_features_to_bf16=False):
    B = batch_size
    D = x_shot_feat.shape[-1]

    if cast_features_to_bf16:
        # Optional: halves feature HBM traffic (this kernel is BW-bound);
        # dots/norms still accumulate in f32 inside the kernel.
        x_shot_feat = x_shot_feat.astype(jnp.bfloat16)
        x_query_feat = x_query_feat.astype(jnp.bfloat16)

    x_shot = x_shot_feat.reshape(B, n_way, n_shot, D)
    x_query = x_query_feat.reshape(B, n_query, D)
    temp_arr = jnp.asarray(temp, jnp.float32).reshape(1)

    out_dtype = x_query.dtype                      # no f32 output inflation
    wp = pl.cdiv(n_way, _LANE) * _LANE             # lane-dense output width

    # Pad D to a multiple of 128 only when it is large and unaligned (e.g.
    # Conv-4 D=1600).  Small D stays unpadded to keep HBM DMA bytes minimal.
    Dp = D
    if D > _LANE and D % _LANE != 0:
        Dp = pl.cdiv(D, _LANE) * _LANE
        x_shot = jnp.pad(x_shot, ((0, 0), (0, 0), (0, 0), (0, Dp - D)))
        x_query = jnp.pad(x_query, ((0, 0), (0, 0), (0, Dp - D)))

    # --- chip-aware sizing ------------------------------------------------
    try:
        vmem_cap = int(pltpu.get_tpu_info().vmem_capacity_bytes)
    except Exception:
        vmem_cap = 64 << 20                         # conservative (v7x)
    try:
        dual_tc = "v7" in jax.devices()[0].device_kind.lower()
    except Exception:
        dual_tc = False

    itemsize = jnp.dtype(x_shot.dtype).itemsize
    out_itemsize = jnp.dtype(out_dtype).itemsize
    # Per-episode bytes: double-buffered BlockSpec I/O + in-kernel f32 temps
    # (padded proto, f32 query, raw+logits).
    io_ep = ((n_way * n_shot * Dp + n_query * Dp) * itemsize
             + n_query * wp * out_itemsize)
    tmp_ep = (wp * Dp + n_query * Dp + 2 * n_query * wp) * 4
    ep_bytes = 2 * io_ep + tmp_ep

    if block_b is None:
        budget = min(vmem_cap // 4, 32 << 20)       # v7x ~16 MiB, v5e/v6e 32 MiB
        block_b = max(1, min(64, budget // max(ep_bytes, 1)))
        if dual_tc and B >= 2:
            # Keep >=2 grid steps only where there are 2 TensorCores.
            block_b = max(1, min(block_b, pl.cdiv(B, 2)))
    block_b = max(1, min(block_b, B))

    n_blocks = pl.cdiv(B, block_b)
    b_padded = n_blocks * block_b
    if b_padded != B:
        pad = b_padded - B
        x_shot = jnp.pad(x_shot, ((0, pad), (0, 0), (0, 0), (0, 0)))
        x_query = jnp.pad(x_query, ((0, pad), (0, 0), (0, 0)))

    # Query-axis split: only to feed both v7x TensorCores when the batch axis
    # gives a single grid step.
    if block_q is None:
        block_q = n_query
        if dual_tc and n_blocks == 1 and n_query >= 16:
            block_q = ((pl.cdiv(n_query, 2) + 7) // 8) * 8
    block_q = max(1, min(block_q, n_query))
    n_qblocks = pl.cdiv(n_query, block_q)
    q_padded = n_qblocks * block_q
    if q_padded != n_query:
        x_query = jnp.pad(x_query, ((0, 0), (0, q_padded - n_query), (0, 0)))

    # Explicit VMEM limit sized to the real per-step working set.
    est_usage = block_b * (
        2 * ((n_way * n_shot * Dp + block_q * Dp) * itemsize
             + block_q * wp * out_itemsize)
        + (wp * Dp + block_q * Dp + 2 * block_q * wp) * 4)
    vmem_limit = int(min(max(2 * est_usage, 32 << 20), (vmem_cap * 3) // 4))

    kernel = functools.partial(_meta_baseline_kernel, method=method)

    out_padded = pl.pallas_call(
        kernel,
        out_shape=jax.ShapeDtypeStruct((b_padded, q_padded, wp), out_dtype),
        grid_spec=pltpu.PrefetchScalarGridSpec(
            num_scalar_prefetch=1,                  # temp lands in SMEM
            grid=(n_blocks, n_qblocks),
            in_specs=[
                pl.BlockSpec((block_b, n_way, n_shot, Dp),
                             lambda b, q, _t: (b, 0, 0, 0)),
                pl.BlockSpec((block_b, block_q, Dp),
                             lambda b, q, _t: (b, q, 0)),
            ],
            out_specs=pl.BlockSpec((block_b, block_q, wp),
                                   lambda b, q, _t: (b, q, 0)),
        ),
        compiler_params=pltpu.CompilerParams(
            dimension_semantics=("parallel", "parallel"),
            vmem_limit_bytes=vmem_limit,
        ),
    )(temp_arr, x_shot, x_query)

    return out_padded[:B, :n_query, :n_way]


if __name__ == "__main__":
    # Small shapes consistent with the forward signature.
    B, n_way, n_shot, n_query, D = 2, 4, 2, 8, 32

    key = jax.random.PRNGKey(0)
    k1, k2 = jax.random.split(key)
    x_shot_feat = jax.random.normal(k1, (B * n_way * n_shot, D), jnp.float32)
    x_query_feat = jax.random.normal(k2, (B * n_query, D), jnp.float32)

    temp = jnp.float32(10.0)   # nn.Parameter(torch.tensor(10.0))

    # --- pure-JAX references (same semantics as the torch forward) -------
    xs_proto = x_shot_feat.reshape(B, n_way, n_shot, D).mean(axis=2)
    xq = x_query_feat.reshape(B, n_query, D)

    xs_n = xs_proto / jnp.maximum(
        jnp.linalg.norm(xs_proto, axis=-1, keepdims=True), _EPS)
    xq_n = xq / jnp.maximum(jnp.linalg.norm(xq, axis=-1, keepdims=True), _EPS)
    ref_cos = jnp.einsum("bqd,bwd->bqw", xq_n, xs_n) * 10.0

    ref_sqr = -jnp.sum(
        (xq[:, :, None, :] - xs_proto[:, None, :, :]) ** 2, axis=-1) * 10.0

    # --- cos path (auto block size) --------------------------------------
    logits = meta_baseline(x_shot_feat, x_query_feat, temp,
                           B, n_way, n_shot, n_query, method="cos")
    jax.block_until_ready(logits)
    assert logits.shape == (B, n_query, n_way)
    assert jnp.allclose(logits, ref_cos, rtol=1e-4, atol=1e-3), \
        float(jnp.max(jnp.abs(logits - ref_cos)))

    # --- cos path, explicit batch-blocking (BB=2, single batch step) ------
    logits_bb = meta_baseline(x_shot_feat, x_query_feat, temp,
                              B, n_way, n_shot, n_query,
                              method="cos", block_b=2)
    jax.block_until_ready(logits_bb)
    assert jnp.allclose(logits_bb, ref_cos, rtol=1e-4, atol=1e-3), \
        float(jnp.max(jnp.abs(logits_bb - ref_cos)))

    # --- sqr path ---------------------------------------------------------
    logits_sqr = meta_baseline(x_shot_feat, x_query_feat, temp,
                               B, n_way, n_shot, n_query, method="sqr")
    jax.block_until_ready(logits_sqr)
    assert jnp.allclose(logits_sqr, ref_sqr, rtol=1e-4, atol=1e-2), \
        float(jnp.max(jnp.abs(logits_sqr - ref_sqr)))

    print("KERNEL_OK")
</pallas_src>

<mosaic_0001>
module attributes {stable_mosaic.version = 11 : i64} {
  func.func @_meta_baseline_kernel(%arg0: i32, %arg1: i32, %arg2: memref<1xf32, #tpu.memory_space<smem>>, %arg3: memref<2x4x2x32xf32, #tpu.memory_space<vmem>>, %arg4: memref<2x8x32xf32, #tpu.memory_space<vmem>>, %arg5: memref<2x8x128xf32, #tpu.memory_space<vmem>>) attributes {dimension_semantics = [#tpu.dimension_semantics<parallel>, #tpu.dimension_semantics<parallel>], iteration_bounds = array<i64: 1, 1>, scalar_prefetch = 1 : i64, scratch_operands = 0 : i64, tpu.core_type = #tpu.core_type<tc>, window_params = [{transform_indices = @transform_0, window_bounds = array<i64: 2, 4, 2, 32>}, {transform_indices = @transform_1, window_bounds = array<i64: 2, 8, 32>}, {transform_indices = @transform_2, window_bounds = array<i64: 2, 8, 128>}]} {
    %c0 = arith.constant 0 : index
    %0 = memref.load %arg2[%c0] : memref<1xf32, #tpu.memory_space<smem>>
    %c0_0 = arith.constant 0 : index
    %c0_1 = arith.constant 0 : index
    %c0_2 = arith.constant 0 : index
    %c0_3 = arith.constant 0 : index
    %1 = vector.load %arg3[%c0_0, %c0_1, %c0_2, %c0_3] : memref<2x4x2x32xf32, #tpu.memory_space<vmem>>, vector<2x4x2x32xf32>
    %c0_4 = arith.constant 0 : index
    %c0_5 = arith.constant 0 : index
    %c0_6 = arith.constant 0 : index
    %2 = vector.load %arg4[%c0_4, %c0_5, %c0_6] : memref<2x8x32xf32, #tpu.memory_space<vmem>>, vector<2x8x32xf32>
    %cst = arith.constant dense<0.000000e+00> : vector<2x4x32xf32>
    %3 = vector.multi_reduction <add>, %1, %cst [2] : vector<2x4x2x32xf32> to vector<2x4x32xf32>
    %cst_7 = arith.constant 5.000000e-01 : f32
    %4 = vector.broadcast %cst_7 : f32 to vector<2x4x32xf32>
    %5 = arith.mulf %3, %4 : vector<2x4x32xf32>
    %cst_8 = arith.constant 0.000000e+00 : f32
    %6 = vector.broadcast %cst_8 : f32 to vector<2x124x32xf32>
    %7 = tpu.concatenate %5, %6 in 1 : vector<2x4x32xf32>, vector<2x124x32xf32> -> vector<2x128x32xf32>
    %8 = arith.mulf %7, %7 : vector<2x128x32xf32>
    %cst_9 = arith.constant dense<0.000000e+00> : vector<2x128xf32>
    %9 = vector.multi_reduction <add>, %8, %cst_9 [2] : vector<2x128x32xf32> to vector<2x128xf32>
    %10 = arith.mulf %2, %2 : vector<2x8x32xf32>
    %cst_10 = arith.constant dense<0.000000e+00> : vector<2x8xf32>
    %11 = vector.multi_reduction <add>, %10, %cst_10 [2] : vector<2x8x32xf32> to vector<2x8xf32>
    %12 = vector.shape_cast %11 : vector<2x8xf32> to vector<2x8x1xf32>
    "tpu.trace_start"() <{level = 10 : i32, message = "bqd,bwd->bqw"}> : () -> ()
    %cst_11 = arith.constant dense<0.000000e+00> : vector<2x8x128xf32>
    %13 = tpu.matmul %2, %7, %cst_11 {dimension_numbers = #tpu.dot_dimension_numbers<[2], [2], [1], [1], [0, 0, 0, 1, 1, 1], [0], [0]>} : vector<2x8x32xf32>, vector<2x128x32xf32>, vector<2x8x128xf32> -> vector<2x8x128xf32>
    "tpu.trace_stop"() : () -> ()
    %cst_12 = arith.constant 1.000000e-24 : f32
    %14 = vector.broadcast %cst_12 : f32 to vector<2x8x1xf32>
    %15 = arith.maximumf %12, %14 : vector<2x8x1xf32>
    %16 = math.rsqrt %15 : vector<2x8x1xf32>
    %cst_13 = arith.constant 1.000000e-24 : f32
    %17 = vector.broadcast %cst_13 : f32 to vector<2x128xf32>
    %18 = arith.maximumf %9, %17 : vector<2x128xf32>
    %19 = math.rsqrt %18 : vector<2x128xf32>
    %20 = vector.broadcast %0 : f32 to vector<2x8x1xf32>
    %21 = arith.mulf %20, %16 : vector<2x8x1xf32>
    %22 = vector.broadcast %21 : vector<2x8x1xf32> to vector<2x8x128xf32>
    %23 = arith.mulf %13, %22 : vector<2x8x128xf32>
    %24 = vector.shape_cast %19 : vector<2x128xf32> to vector<2x1x128xf32>
    %25 = vector.broadcast %24 : vector<2x1x128xf32> to vector<2x8x128xf32>
    %26 = arith.mulf %23, %25 : vector<2x8x128xf32>
    %c0_14 = arith.constant 0 : index
    %c0_15 = arith.constant 0 : index
    %c0_16 = arith.constant 0 : index
    %27 = vector.load %arg5[%c0_14, %c0_15, %c0_16] : memref<2x8x128xf32, #tpu.memory_space<vmem>>, vector<2x8x128xf32>
    tpu.vector_store %arg5[%c0_14, %c0_15, %c0_16], %26 {strides = array<i32>} : memref<2x8x128xf32, #tpu.memory_space<vmem>>, vector<2x8x128xf32>,
    return
  }
  func.func @transform_0(%arg0: i32, %arg1: i32, %arg2: memref<1xf32, #tpu.memory_space<smem>>) -> (i32, i32, i32, i32) {
    %c0_i32 = arith.constant 0 : i32
    %c0_i32_0 = arith.constant 0 : i32
    %c0_i32_1 = arith.constant 0 : i32
    %c0_i32_2 = arith.constant 0 : i32
    return %arg0, %c0_i32, %c0_i32_0, %c0_i32_1 : i32, i32, i32, i32
  }
  func.func @transform_1(%arg0: i32, %arg1: i32, %arg2: memref<1xf32, #tpu.memory_space<smem>>) -> (i32, i32, i32) {
    %c0_i32 = arith.constant 0 : i32
    %c0_i32_0 = arith.constant 0 : i32
    return %arg0, %arg1, %c0_i32 : i32, i32, i32
  }
  func.func @transform_2(%arg0: i32, %arg1: i32, %arg2: memref<1xf32, #tpu.memory_space<smem>>) -> (i32, i32, i32) {
    %c0_i32 = arith.constant 0 : i32
    %c0_i32_0 = arith.constant 0 : i32
    return %arg0, %arg1, %c0_i32 : i32, i32, i32
  }
}

</mosaic_0001>

<llo_original>
// kernel: tpu_custom_call.1
$region0: #{tpu_custom_call.1}
  #allocation0 [shape = 'u32[]', space=smem, size = 0x4, offset = 0x4, fixed_abs, tag = 'smem constant byte address 0x4 - core index']
  #allocation1 [shape = 'u32[72,128]{1,0:T(1,128)}', space=vmem, size = 0x9000, scoped, tag = 'internal scratch']
  #allocation2 [shape = 's32[1]{0}', space=sflag, size = 0x4, scoped, tag = 'scoped memory for tpu_custom_call.1']
  #allocation3 [shape = 'f32[1]{0:T(128)S(6)}', space=smem, size = 0x200, scoped, tag = 'prefetched SMEM operand 0']
  %s0 = inlined_call_operand.<no memory space> [shape: f32[1], index: 0, kind: input, shape index: {}]
  %s1 = inlined_call_operand.hbm [shape: f32[2,4,2,32], index: 1, kind: input, shape index: {}]
  %s2 = inlined_call_operand.hbm [shape: f32[2,8,32], index: 2, kind: input, shape index: {}]
  %s3 = inlined_call_operand.hbm [shape: f32[2,8,128], index: 3, kind: output, shape index: {}]
  %s4 = sld [smem:[#allocation0]]
  $region26: #{tpu_custom_call.1} parent=0
    _
  %s6 = ssub.s32 1, %s4
  %s7 = scalar_select 0, %s6, %s4
  %8 = sst [smem:[#allocation3]] %s0
  $region1: #{tpu_custom_call.1} parent=0
    #allocation4 [shape = 'u8[8192]{0}', space=vmem, size = 0x2000, scoped, tag = 'input window, operand 1, single buffered']
    #allocation5 [shape = 's32[1]{0}', space=sflag, size = 0x4, scoped, tag = 'scoped memory for tpu_custom_call.1']
    #allocation6 [shape = 's32[1]{0}', space=sflag, size = 0x4, scoped, tag = 'scoped memory for tpu_custom_call.1']
    #allocation7 [shape = 'u8[8192]{0}', space=vmem, size = 0x2000, scoped, tag = 'input window, operand 2, single buffered']
    #allocation8 [shape = 's32[1]{0}', space=sflag, size = 0x4, scoped, tag = 'scoped memory for tpu_custom_call.1']
    #allocation9 [shape = 'u8[8192]{0}', space=vmem, size = 0x2000, scoped, tag = 'output window, operand 0, single buffered']
    %9 = vsyncpa [#allocation5], 0
    %10 = vsyncpa [#allocation8], 0
    %11 = vsyncpa [#allocation6], 0
    // Predicated region
    $region2: #{tpu_custom_call.1} parent=1 // pred_check
      _
    $region3: #{tpu_custom_call.1} parent=1 // pred_check_branch
      %13 = sbr.rel (0) target = $region5
    $region4: #{tpu_custom_call.1} parent=1 // pred_region
      %15 = vsyncadd [#allocation5], 0
      %s16 = sshll.u32 %s1, 4
      %s17 = int_to_ptr.hbm [resolvable:$true] %s16
      %s18 = sshll.u32 [#allocation4], 4
      %s19 = int_to_ptr.vmem [resolvable:$true] %s18
      %24 = dma.hbm_to_vmem [thread:$0]  %s17, 256, %s19, [#allocation5], 32, 32, 2
    $region5: #{tpu_custom_call.1} parent=1 // pred_fallthru
      _
    // Predicated region
    $region6: #{tpu_custom_call.1} parent=1 // pred_check
      _
    $region7: #{tpu_custom_call.1} parent=1 // pred_check_branch
      %26 = sbr.rel (0) target = $region9
    $region8: #{tpu_custom_call.1} parent=1 // pred_region
      %28 = vsyncadd [#allocation8], 0
      %s29 = sshll.u32 %s2, 4
      %s30 = int_to_ptr.hbm [resolvable:$true] %s29
      %s31 = sshll.u32 [#allocation7], 4
      %s32 = int_to_ptr.vmem [resolvable:$true] %s31
      %37 = dma.hbm_to_vmem [thread:$0]  %s30, 256, %s32, [#allocation8], 128, 128, 8
    $region9: #{tpu_custom_call.1} parent=1 // pred_fallthru
      _
    // Predicated region
    $region10: #{tpu_custom_call.1} parent=1 // pred_check
      _
    $region11: #{tpu_custom_call.1} parent=1 // pred_check_branch
      %39 = sbr.rel (0) target = $region13
    $region12: #{tpu_custom_call.1} parent=1 // pred_region
      %41 = dma.done [#allocation5], 256
    $region13: #{tpu_custom_call.1} parent=1 // pred_fallthru
      _
    // Predicated region
    $region14: #{tpu_custom_call.1} parent=1 // pred_check
      _
    $region15: #{tpu_custom_call.1} parent=1 // pred_check_branch
      %43 = sbr.rel (0) target = $region17
    $region16: #{tpu_custom_call.1} parent=1 // pred_region
      %45 = dma.done [#allocation8], 256
    $region17: #{tpu_custom_call.1} parent=1 // pred_fallthru
      _
    %s46 = sld [smem:[#allocation3]]
    %v47 = vld [vmem:[#allocation4] sm:$0x3]
    %v48 = vld [vmem:[#allocation4 + $0x2] sm:$0x3]
    %v49 = vld [vmem:[#allocation4 + $0x4] sm:$0x3]
    %v50 = vld [vmem:[#allocation4 + $0x6] sm:$0x3]
    %v51 = vld [vmem:[#allocation4 + $0x8] sm:$0x3]
    %v52 = vld [vmem:[#allocation4 + $0xa] sm:$0x3]
    %v53 = vld [vmem:[#allocation4 + $0xc] sm:$0x3]
    %v54 = vld [vmem:[#allocation4 + $0xe] sm:$0x3]
    %v55 = vld [vmem:[#allocation7] sm:$0xff]
    %v56 = vld [vmem:[#allocation7 + $0x8] sm:$0xff]
    %vm57 = vcmask 254976
    %v58 = vsel %vm57, %v47, 0.0
    %v59 = vrot.slane %v58, 4
    %v60 = vadd.f32 %v58, %v59
    %v61 = vrot.slane %v60, 2
    %v62 = vadd.f32 %v60, %v61
    %v63 = vrot.slane %v62, 1
    %v64 = vadd.f32 %v62, %v63
    %v65 = vsel %vm57, %v48, 0.0
    %v66 = vrot.slane %v65, 4
    %v67 = vadd.f32 %v65, %v66
    %v68 = vrot.slane %v67, 2
    %v69 = vadd.f32 %v67, %v68
    %v70 = vrot.slane %v69, 1
    %v71 = vadd.f32 %v69, %v70
    %v72 = vsel %vm57, %v49, 0.0
    %v73 = vrot.slane %v72, 4
    %v74 = vadd.f32 %v72, %v73
    %v75 = vrot.slane %v74, 2
    %v76 = vadd.f32 %v74, %v75
    %v77 = vrot.slane %v76, 1
    %v78 = vadd.f32 %v76, %v77
    %v79 = vsel %vm57, %v50, 0.0
    %v80 = vrot.slane %v79, 4
    %v81 = vadd.f32 %v79, %v80
    %v82 = vrot.slane %v81, 2
    %v83 = vadd.f32 %v81, %v82
    %v84 = vrot.slane %v83, 1
    %v85 = vadd.f32 %v83, %v84
    %v86 = vsel %vm57, %v51, 0.0
    %v87 = vrot.slane %v86, 4
    %v88 = vadd.f32 %v86, %v87
    %v89 = vrot.slane %v88, 2
    %v90 = vadd.f32 %v88, %v89
    %v91 = vrot.slane %v90, 1
    %v92 = vadd.f32 %v90, %v91
    %v93 = vsel %vm57, %v52, 0.0
    %v94 = vrot.slane %v93, 4
    %v95 = vadd.f32 %v93, %v94
    %v96 = vrot.slane %v95, 2
    %v97 = vadd.f32 %v95, %v96
    %v98 = vrot.slane %v97, 1
    %v99 = vadd.f32 %v97, %v98
    %v100 = vsel %vm57, %v53, 0.0
    %v101 = vrot.slane %v100, 4
    %v102 = vadd.f32 %v100, %v101
    %v103 = vrot.slane %v102, 2
    %v104 = vadd.f32 %v102, %v103
    %v105 = vrot.slane %v104, 1
    %v106 = vadd.f32 %v104, %v105
    %v107 = vsel %vm57, %v54, 0.0
    %v108 = vrot.slane %v107, 4
    %v109 = vadd.f32 %v107, %v108
    %v110 = vrot.slane %v109, 2
    %v111 = vadd.f32 %v109, %v110
    %v112 = vrot.slane %v111, 1
    %v113 = vadd.f32 %v111, %v112
    %v114 = vmul.f32 %v64, 0.5
    %v115 = vmul.f32 %v71, 0.5
    %v116 = vmul.f32 %v78, 0.5
    %v117 = vmul.f32 %v85, 0.5
    %v118 = vmul.f32 %v92, 0.5
    %v119 = vmul.f32 %v99, 0.5
    %v120 = vmul.f32 %v106, 0.5
    %v121 = vmul.f32 %v113, 0.5
    %vm130 = vcmask 1041409
    %v131 = vsel %vm130, %v115, %v114
    %vm132 = vcmask 1042434
    %v133 = vsel %vm132, %v116, %v131
    %vm134 = vcmask 1043459
    %v135 = vsel %vm134, %v117, %v133
    %v136 = vsel %vm130, %v119, %v118
    %v137 = vsel %vm132, %v120, %v136
    %v138 = vsel %vm134, %v121, %v137
    %vm141 = vcmask 1043456
    %v142 = vsel %vm141, %v135, 0.0
    %v143 = vsel %vm141, %v138, 0.0
    %v144 = vmul.f32 %v142, %v142
    %v145 = vmul.f32 %v143, %v143
    %vm146 = vcmask 261120
    %v147 = vsel %vm146, %v144, 0.0
    %148 = vadd.xlane.f32.xlu0 %v147
    %v149 = vpop.xlane.xlu0 %148
    %150 = vadd.xlane.f32.xlu0 0.0
    %v151 = vpop.xlane.xlu0 %150
    %v152 = vsel %vm146, %v145, 0.0
    %153 = vadd.xlane.f32.xlu0 %v152
    %v154 = vpop.xlane.xlu0 %153
    %v155 = vmul.f32 %v55, %v55
    %v156 = vmul.f32 %v56, %v56
    %v157 = vsel %vm146, %v155, 0.0
    %158 = vadd.xlane.f32.xlu0 %v157
    %v159 = vpop.xlane.xlu0 %158
    %v160 = vsel %vm146, %v156, 0.0
    %161 = vadd.xlane.f32.xlu0 %v160
    %v162 = vpop.xlane.xlu0 %161
    %v164 = vsel %vm146, %v55, 0
    %v167 = vsel %vm146, %v142, 0
    %v170 = vsel %vm146, 0.0, 0
    %172 = vmatpush.xpose.msra.mxu0 %v170
    %173 = vmatpush.xpose.msra.mxu0 %v170
    %174 = vmatpush.xpose.msra.mxu0 %v170
    %175 = vmatpush.xpose.msra.mxu0 %v170
    %176 = vmatpush.xpose.msra.mxu0 %v170
    %177 = vmatpush.xpose.msra.mxu0 %v170
    %178 = vmatpush.xpose.msra.mxu0 %v170
    %179 = vmatpush.xpose.msra.mxu0 %v170
    %180 = vmatpush.xpose.msra.mxu0 %v170
    %181 = vmatpush.xpose.msra.mxu0 %v170
    %182 = vmatpush.xpose.msra.mxu0 %v170
    %183 = vmatpush.xpose.msra.mxu0 %v170
    %184 = vmatpush.xpose.msra.mxu0 %v170
    %185 = vmatpush.xpose.msra.mxu0 %v170
    %186 = vmatpush.xpose.msra.mxu0 %v170
    %187 = vmatpush.xpose.msra.mxu0 %v167
    %188 = vmatmul.f32.gmra.mxu0 %v164
    %v189 = vpop.f32.mrf.mxu0
    %v190 = vadd.f32 0.0, %v189
    %191 = vdwg.mxu0
    %v193 = vsel %vm146, %v56, 0
    %v196 = vsel %vm146, %v143, 0
    %198 = vmatpush.xpose.msra.mxu0 %v170
    %199 = vmatpush.xpose.msra.mxu0 %v170
    %200 = vmatpush.xpose.msra.mxu0 %v170
    %201 = vmatpush.xpose.msra.mxu0 %v170
    %202 = vmatpush.xpose.msra.mxu0 %v170
    %203 = vmatpush.xpose.msra.mxu0 %v170
    %204 = vmatpush.xpose.msra.mxu0 %v170
    %205 = vmatpush.xpose.msra.mxu0 %v170
    %206 = vmatpush.xpose.msra.mxu0 %v170
    %207 = vmatpush.xpose.msra.mxu0 %v170
    %208 = vmatpush.xpose.msra.mxu0 %v170
    %209 = vmatpush.xpose.msra.mxu0 %v170
    %210 = vmatpush.xpose.msra.mxu0 %v170
    %211 = vmatpush.xpose.msra.mxu0 %v170
    %212 = vmatpush.xpose.msra.mxu0 %v170
    %213 = vmatpush.xpose.msra.mxu0 %v196
    %214 = vmatmul.f32.gmra.mxu0 %v193
    %v215 = vpop.f32.mrf.mxu0
    %v216 = vadd.f32 0.0, %v215
    %217 = vdwg.mxu0
    %v218 = vmax.f32 %v159, 1e-24
    %v219 = vmax.f32 %v162, 1e-24
    %v220 = vrsqrt.pop %v218
    %v221 = vmul.f32 %v220, %v218
    %v222 = vmul.f32 %v221, %v220
    %v223 = vmul.f32 0.5, %v222
    %v224 = vsub.f32 1.5, %v223
    %v225 = vmul.f32 %v220, %v224
    %vm226 = vweird.f32 %v218
    %vm227 = vweird.f32 %v220
    %vm228 = vmor %vm226, %vm227
    %v229 = vsel %vm228, %v220, %v225
    %v230 = vrsqrt.pop %v219
    %v231 = vmul.f32 %v230, %v219
    %v232 = vmul.f32 %v231, %v230
    %v233 = vmul.f32 0.5, %v232
    %v234 = vsub.f32 1.5, %v233
    %v235 = vmul.f32 %v230, %v234
    %vm236 = vweird.f32 %v219
    %vm237 = vweird.f32 %v230
    %vm238 = vmor %vm236, %vm237
    %v239 = vsel %vm238, %v230, %v235
    %v240 = vmax.f32 %v149, 1e-24
    %v241 = vmax.f32 %v151, 1e-24
    %v242 = vmax.f32 %v154, 1e-24
    %v243 = vrsqrt.pop %v240
    %v244 = vmul.f32 %v243, %v240
    %v245 = vmul.f32 %v244, %v243
    %v246 = vmul.f32 0.5, %v245
    %v247 = vsub.f32 1.5, %v246
    %v248 = vmul.f32 %v243, %v247
    %vm249 = vweird.f32 %v240
    %vm250 = vweird.f32 %v243
    %vm251 = vmor %vm249, %vm250
    %v252 = vsel %vm251, %v243, %v248
    %v253 = vrsqrt.pop %v241
    %v254 = vmul.f32 %v253, %v241
    %v255 = vmul.f32 %v254, %v253
    %v256 = vmul.f32 0.5, %v255
    %v257 = vsub.f32 1.5, %v256
    %v258 = vmul.f32 %v253, %v257
    %vm259 = vweird.f32 %v241
    %vm260 = vweird.f32 %v253
    %vm261 = vmor %vm259, %vm260
    %v262 = vsel %vm261, %v253, %v258
    %v263 = vrsqrt.pop %v242
    %v264 = vmul.f32 %v263, %v242
    %v265 = vmul.f32 %v264, %v263
    %v266 = vmul.f32 0.5, %v265
    %v267 = vsub.f32 1.5, %v266
    %v268 = vmul.f32 %v263, %v267
    %vm269 = vweird.f32 %v242
    %vm270 = vweird.f32 %v263
    %vm271 = vmor %vm269, %vm270
    %v272 = vsel %vm271, %v263, %v268
    %v273 = vstv %s46
    %v274 = vmul.f32 %v273, %v229
    %v275 = vmul.f32 %v273, %v239
    %v276 = vmul.f32 %v190, %v274
    %v277 = vmul.f32 %v216, %v275
    %v281 = vlaneseq
    %v282 = vand.u32 %v281, 127
    %v283 = vperm.slane %v252, %v282
    %v284 = vadd.s32 %v282, 4294967288
    %v285 = vperm.slane %v262, %v284
    %vm286 = vcmask 130112
    %v287 = vsel %vm286, %v285, %v283
    %v288 = vadd.s32 %v282, 4294967280
    %v289 = vperm.slane %v262, %v288
    %vm290 = vcmask 195712
    %v291 = vsel %vm290, %v289, %v287
    %v292 = vadd.s32 %v282, 4294967272
    %v293 = vperm.slane %v262, %v292
    %vm294 = vcmask 261312
    %v295 = vsel %vm294, %v293, %v291
    %v296 = vadd.s32 %v282, 4294967264
    %v297 = vperm.slane %v262, %v296
    %vm298 = vcmask 326912
    %v299 = vsel %vm298, %v297, %v295
    %v300 = vadd.s32 %v282, 4294967256
    %v301 = vperm.slane %v262, %v300
    %vm302 = vcmask 392512
    %v303 = vsel %vm302, %v301, %v299
    %v304 = vadd.s32 %v282, 4294967248
    %v305 = vperm.slane %v262, %v304
    %vm306 = vcmask 458112
    %v307 = vsel %vm306, %v305, %v303
    %v308 = vadd.s32 %v282, 4294967240
    %v309 = vperm.slane %v262, %v308
    %vm310 = vcmask 523712
    %v311 = vsel %vm310, %v309, %v307
    %v312 = vadd.s32 %v282, 4294967232
    %v313 = vperm.slane %v262, %v312
    %vm314 = vcmask 589312
    %v315 = vsel %vm314, %v313, %v311
    %v316 = vadd.s32 %v282, 4294967224
    %v317 = vperm.slane %v262, %v316
    %vm318 = vcmask 654912
    %v319 = vsel %vm318, %v317, %v315
    %v320 = vadd.s32 %v282, 4294967216
    %v321 = vperm.slane %v262, %v320
    %vm322 = vcmask 720512
    %v323 = vsel %vm322, %v321, %v319
    %v324 = vadd.s32 %v282, 4294967208
    %v325 = vperm.slane %v262, %v324
    %vm326 = vcmask 786112
    %v327 = vsel %vm326, %v325, %v323
    %v328 = vadd.s32 %v282, 4294967200
    %v329 = vperm.slane %v262, %v328
    %vm330 = vcmask 851712
    %v331 = vsel %vm330, %v329, %v327
    %v332 = vadd.s32 %v282, 4294967192
    %v333 = vperm.slane %v262, %v332
    %vm334 = vcmask 917312
    %v335 = vsel %vm334, %v333, %v331
    %v336 = vadd.s32 %v282, 4294967184
    %v337 = vperm.slane %v262, %v336
    %vm338 = vcmask 982912
    %v339 = vsel %vm338, %v337, %v335
    %v340 = vadd.s32 %v282, 4294967176
    %v341 = vperm.slane %v262, %v340
    %vm342 = vcmask 1048512
    %v343 = vsel %vm342, %v341, %v339
    %v344 = vperm.slane %v272, %v282
    %v345 = vsel %vm286, %v285, %v344
    %v346 = vsel %vm290, %v289, %v345
    %v347 = vsel %vm294, %v293, %v346
    %v348 = vsel %vm298, %v297, %v347
    %v349 = vsel %vm302, %v301, %v348
    %v350 = vsel %vm306, %v305, %v349
    %v351 = vsel %vm310, %v309, %v350
    %v352 = vsel %vm314, %v313, %v351
    %v353 = vsel %vm318, %v317, %v352
    %v354 = vsel %vm322, %v321, %v353
    %v355 = vsel %vm326, %v325, %v354
    %v356 = vsel %vm330, %v329, %v355
    %v357 = vsel %vm334, %v333, %v356
    %v358 = vsel %vm338, %v337, %v357
    %v359 = vsel %vm342, %v341, %v358
    %v360 = vsel %vm132, %v343, %v343
    %v361 = vsel %vm134, %v343, %v360
    %vm362 = vcmask 1044484
    %v363 = vsel %vm362, %v343, %v361
    %vm364 = vcmask 1045509
    %v365 = vsel %vm364, %v343, %v363
    %vm366 = vcmask 1046534
    %v367 = vsel %vm366, %v343, %v365
    %vm368 = vcmask 1047559
    %v369 = vsel %vm368, %v343, %v367
    %v370 = vsel %vm132, %v359, %v359
    %v371 = vsel %vm134, %v359, %v370
    %v372 = vsel %vm362, %v359, %v371
    %v373 = vsel %vm364, %v359, %v372
    %v374 = vsel %vm366, %v359, %v373
    %v375 = vsel %vm368, %v359, %v374
    %v378 = vmul.f32 %v276, %v369
    %v379 = vmul.f32 %v277, %v375
    %380 = vst [vmem:[#allocation9] sm:$0xff] %v378
    %381 = vst [vmem:[#allocation9 + $0x8] sm:$0xff] %v379
    // Predicated region
    $region18: #{tpu_custom_call.1} parent=1 // pred_check
      _
    $region19: #{tpu_custom_call.1} parent=1 // pred_check_branch
      %383 = sbr.rel (0) target = $region21
    $region20: #{tpu_custom_call.1} parent=1 // pred_region
      %385 = vsyncadd [#allocation6], 0
      %s386 = sshll.u32 [#allocation9], 4
      %s387 = int_to_ptr.vmem [resolvable:$true] %s386
      %s388 = sshll.u32 %s3, 4
      %s389 = int_to_ptr.hbm [resolvable:$true] %s388
      %394 = dma.vmem_to_hbm [thread:$0]  %s387, 256, %s389, [#allocation6], 128, 128, 8
    $region21: #{tpu_custom_call.1} parent=1 // pred_fallthru
      _
    // Predicated region
    $region22: #{tpu_custom_call.1} parent=1 // pred_check
      _
    $region23: #{tpu_custom_call.1} parent=1 // pred_check_branch
      %396 = sbr.rel (0) target = $region25
    $region24: #{tpu_custom_call.1} parent=1 // pred_region
      %398 = dma.done [#allocation6], 256
    $region25: #{tpu_custom_call.1} parent=1 // pred_fallthru
      _
    %399 = vsyncpa [#allocation5], 1
    %400 = vsyncpa [#allocation8], 1
    %401 = vsyncpa [#allocation6], 1

</llo_original>
